<compile_context>
chip_gen: v5e
topology: v5e:2x2
jax: 0.10.0
libtpu: 0.0.40
codegen_flags: <defaults>
</compile_context>

<pallas_src>
import functools

import jax
import jax.numpy as jnp
from jax.experimental import pallas as pl
from jax.experimental.pallas import tpu as pltpu

_EPS = 1e-5


def _round_up(x, m):
    return ((x + m - 1) // m) * m


_VMEM_LIMIT_CACHE = [None]


def _vmem_limit_bytes():
    """Generation-aware scoped-VMEM budget: ~half of physical VMEM
    (≈32 MiB on a 64 MiB v7x core, 64 MiB on 128 MiB v5e/v6e)."""
    if _VMEM_LIMIT_CACHE[0] is None:
        cap = 128 * 1024 * 1024
        try:
            info = pltpu.get_tpu_info()
            cap = int(getattr(info, "vmem_capacity_bytes", cap) or cap)
        except Exception:
            pass
        _VMEM_LIMIT_CACHE[0] = int(max(32 * 1024 * 1024,
                                       min(96 * 1024 * 1024, cap // 2)))
    return _VMEM_LIMIT_CACHE[0]


def _plan_tiles(hw, target, align):
    """Pick (thw, hw_pad): spatial tile (multiple of `align`) and padded HW.

    If HW has an aligned divisor <= target we use it (no padding).  Otherwise
    HW is zero-padded up to a multiple of the target tile; the stats kernel
    removes the padded rows from the reduction exactly.
    """
    target = int(max(align, min(int(target), _round_up(hw, align))))
    target -= target % align
    if hw % align == 0:
        t = target
        while t >= align:
            if hw % t == 0:
                return t, hw
            t -= align
    thw = target
    return thw, _round_up(hw, thw)


def _auto_tile_target(hw, h_nc, a1_nc, a2_nc, nb, io_bytes, mm_bytes, vmem_limit):
    """Rough per-row VMEM model of the apply pass -> largest safe spatial tile."""
    off = _round_up(h_nc, 128)
    slab_w = off + h_nc
    per_row = (2 * io_bytes * (h_nc + a1_nc + a2_nc + nb * h_nc)   # double-buffered blocks
               + 4 * (h_nc + 3 * slab_w)                           # f32 in-kernel temporaries
               + 2 * 4 * nb)                                       # mask blocks
    # Weight slabs + biases are constant-index but still double-buffered by the
    # default pipeline, so count them twice.  (pl.Buffered(1) single-buffering
    # is a further v7x option; left out to keep the lowering conservative.)
    fixed = 2 * nb * (mm_bytes * (a1_nc + a2_nc) * slab_w
                      + 4 * 2 * slab_w + 4 * (h_nc + 1))
    budget = int(vmem_limit * 0.6) - fixed
    rows = max(128, budget // max(per_row, 1))
    return int(min(rows, 2048, _round_up(hw, 8)))


def _rows(x, io, pad):
    """NHWC -> (N, HW(+pad), C): contiguous reshape + dtype cast (+ zero pad)."""
    r = x.reshape(x.shape[0], -1, x.shape[-1]).astype(io)
    if pad:
        r = jnp.pad(r, ((0, 0), (0, pad), (0, 0)))
    return r


def _const_index_map(ndim):
    return lambda n, t: (0,) * ndim


# ---------------------------------------------------------------------------
# Kernel 1: instance-norm statistics.  Grid (N, HW tiles); the tile axis is a
# reduction ("arbitrary"): shifted per-channel sum / sum-of-squares accumulate
# in VMEM scratch and mean / rstd are emitted on the last tile.
# ---------------------------------------------------------------------------
def _in_stats_kernel(h_ref, mean_ref, rstd_ref, shift_acc, sum_acc, sq_acc, *,
                     inv_hw, pad_rows):
    t = pl.program_id(1)
    x = h_ref[0].astype(jnp.float32)                         # (THW, h_nc)

    @pl.when(t == 0)
    def _init():
        # Assumed-mean shift taken from the first row: keeps the single-pass
        # E[x^2]-E[x]^2 combine well conditioned for large means / large HW.
        shift_acc[...] = x[0:1, :]
        sum_acc[...] = jnp.zeros_like(sum_acc)
        sq_acc[...] = jnp.zeros_like(sq_acc)

    xc = x - shift_acc[...]
    sum_acc[...] += jnp.sum(xc, axis=0, keepdims=True)       # (1, h_nc)
    sq_acc[...] += jnp.sum(xc * xc, axis=0, keepdims=True)

    @pl.when(t == pl.num_programs(1) - 1)
    def _finalize():
        shift = shift_acc[...]
        s1 = sum_acc[...]
        s2 = sq_acc[...]
        if pad_rows:  # zero-padded tail rows contributed (0 - shift) each; remove exactly.
            s1 = s1 + pad_rows * shift
            s2 = s2 - pad_rows * (shift * shift)
        mean_c = s1 * inv_hw
        var = jnp.maximum(s2 * inv_hw - mean_c * mean_c, 0.0)
        mean_ref[0] = shift + mean_c
        rstd_ref[0] = jax.lax.rsqrt(var + _EPS)


# ---------------------------------------------------------------------------
# Kernel 2: per (n, HW-tile) normalize + fused gamma|beta 1x1 convs + mask +
# blend, for `nb` AAD branches that share the same normalized h and the same
# a1/a2 tiles (main path + learned shortcut).  Grid axes are independent
# ("parallel", "parallel").
# ---------------------------------------------------------------------------
def _aad_apply_kernel(h_ref, a1_ref, a2_ref, mean_ref, rstd_ref, *refs,
                      h_nc, off, nb, mm_dtype):
    w_refs = refs[:6 * nb]
    out_refs = refs[6 * nb:]

    # InstanceNorm2d(affine=False) using precomputed per-(n, c) stats (f32).
    h = (h_ref[0].astype(jnp.float32) - mean_ref[0]) * rstd_ref[0]   # (THW, h_nc)
    # Cast the shared attribute tiles once for all branches (bf16 on v5e frees
    # MXU throughput; accumulation stays f32).
    a1 = a1_ref[0].astype(mm_dtype)
    a2 = a2_ref[0].astype(mm_dtype)

    for b in range(nb):
        w1, b1, w2, b2, wh, bh = w_refs[6 * b:6 * b + 6]

        # ONE fused (gamma|pad|beta) matmul per attribute tensor.
        gb1 = jnp.dot(a1, w1[...], preferred_element_type=jnp.float32) + b1[...]
        gb2 = jnp.dot(a2, w2[...], preferred_element_type=jnp.float32) + b2[...]

        # Mask logit: VPU multiply + lane reduction (no degenerate h_nc->1 MXU op).
        logit = jnp.sum(h * wh[...], axis=-1, keepdims=True) + bh[...]
        mask = jax.nn.sigmoid(logit)                                 # (THW, 1)

        # Blend the packed gamma|beta slab once: (1-M)*gb1 + M*gb2.
        gb = gb1 + mask * (gb2 - gb1)
        gamma = gb[:, :h_nc]
        beta = gb[:, off:off + h_nc]       # beta offset is 128-aligned by construction

        # h_out = (g_eff + 1) * h + b_eff  ==  (1-M)*A1 + M*A2
        out_refs[2 * b][0] = ((gamma + 1.0) * h + beta).astype(out_refs[2 * b].dtype)
        # TODO(synk): M is kept in its narrow (N, HW, 1) form; a lane-dense
        # (1, THW) store would shave masked vst slots but needs an in-kernel
        # sublane->lane relayout.
        out_refs[2 * b + 1][0] = mask.astype(out_refs[2 * b + 1].dtype)


# ---------------------------------------------------------------------------
# Weight prep: pack gamma|beta (with a 128-aligned beta offset) and cast.
# ---------------------------------------------------------------------------
def _prep_branch_weights(aad_params, h_nc, off, mm_dtype):
    (w_h, b_h,
     w_a1g, b_a1g, w_a1b, b_a1b,
     w_a2g, b_a2g, w_a2b, b_a2b) = aad_params

    def w_slab(wg, wb):
        parts = [wg]
        if off > h_nc:
            parts.append(jnp.zeros((wg.shape[0], off - h_nc), wg.dtype))
        parts.append(wb)
        return jnp.concatenate(parts, axis=1).astype(mm_dtype)        # (a_nc, off + h_nc)

    def b_slab(bg, bb):
        parts = [bg.reshape(1, h_nc).astype(jnp.float32)]
        if off > h_nc:
            parts.append(jnp.zeros((1, off - h_nc), jnp.float32))
        parts.append(bb.reshape(1, h_nc).astype(jnp.float32))
        return jnp.concatenate(parts, axis=1)                         # (1, off + h_nc)

    return (w_slab(w_a1g, w_a1b), b_slab(b_a1g, b_a1b),
            w_slab(w_a2g, w_a2b), b_slab(b_a2g, b_a2b),
            w_h.reshape(1, h_nc).astype(jnp.float32),
            b_h.reshape(1, 1).astype(jnp.float32))


# ---------------------------------------------------------------------------
# Row-level AAD: one stats pass + one apply pass shared by all branches.
# ---------------------------------------------------------------------------
def _aad_rows(h_rows, a1_rows, a2_rows, branches, *, h_nc, thw, hw, hw_pad,
              io, mm, vmem_limit):
    """h_rows/a*_rows: (N, hw_pad, C) already padded.  Returns per-branch
    (h_out_rows, mask_rows), both padded to hw_pad rows.

    Note: when io is bf16, the statistics are computed from the bf16-quantized
    activations (deviation from a pure-f32 reference, covered by tolerance)."""
    N = h_rows.shape[0]
    a1_nc = a1_rows.shape[-1]
    a2_nc = a2_rows.shape[-1]
    nb = len(branches)
    num_t = hw_pad // thw
    pad_rows = hw_pad - hw
    off = _round_up(h_nc, 128)

    # ---- pass 1: instance-norm statistics (reduction over HW tiles) ----
    mean, rstd = pl.pallas_call(
        functools.partial(_in_stats_kernel, inv_hw=1.0 / hw, pad_rows=pad_rows),
        out_shape=(jax.ShapeDtypeStruct((N, 1, h_nc), jnp.float32),
                   jax.ShapeDtypeStruct((N, 1, h_nc), jnp.float32)),
        grid_spec=pltpu.PrefetchScalarGridSpec(
            num_scalar_prefetch=0,
            grid=(N, num_t),
            in_specs=[pl.BlockSpec((1, thw, h_nc), lambda n, t: (n, t, 0))],
            out_specs=[pl.BlockSpec((1, 1, h_nc), lambda n, t: (n, 0, 0)),
                       pl.BlockSpec((1, 1, h_nc), lambda n, t: (n, 0, 0))],
            scratch_shapes=[pltpu.VMEM((1, h_nc), jnp.float32),
                            pltpu.VMEM((1, h_nc), jnp.float32),
                            pltpu.VMEM((1, h_nc), jnp.float32)]),
        compiler_params=pltpu.CompilerParams(
            dimension_semantics=("parallel", "arbitrary"),
            vmem_limit_bytes=vmem_limit),
    )(h_rows)

    # ---- pass 2: normalize + fused 1x1 convs + mask + blend (all branches) ----
    wlist = []
    for bp in branches:
        wlist += list(_prep_branch_weights(bp, h_nc, off, mm))
    weight_specs = [pl.BlockSpec(w.shape, _const_index_map(w.ndim)) for w in wlist]

    out_shapes, out_specs = [], []
    for _ in range(nb):
        out_shapes += [jax.ShapeDtypeStruct((N, hw_pad, h_nc), io),
                       jax.ShapeDtypeStruct((N, hw_pad, 1), jnp.float32)]
        out_specs += [pl.BlockSpec((1, thw, h_nc), lambda n, t: (n, t, 0)),
                      pl.BlockSpec((1, thw, 1), lambda n, t: (n, t, 0))]

    results = pl.pallas_call(
        functools.partial(_aad_apply_kernel, h_nc=h_nc, off=off, nb=nb, mm_dtype=mm),
        out_shape=tuple(out_shapes),
        grid_spec=pltpu.PrefetchScalarGridSpec(
            num_scalar_prefetch=0,
            grid=(N, num_t),
            in_specs=[pl.BlockSpec((1, thw, h_nc), lambda n, t: (n, t, 0)),
                      pl.BlockSpec((1, thw, a1_nc), lambda n, t: (n, t, 0)),
                      pl.BlockSpec((1, thw, a2_nc), lambda n, t: (n, t, 0)),
                      pl.BlockSpec((1, 1, h_nc), lambda n, t: (n, 0, 0)),
                      pl.BlockSpec((1, 1, h_nc), lambda n, t: (n, 0, 0))]
                     + weight_specs,
            out_specs=out_specs),
        compiler_params=pltpu.CompilerParams(
            dimension_semantics=("parallel", "parallel"),
            vmem_limit_bytes=vmem_limit),
    )(h_rows, a1_rows, a2_rows, mean, rstd, *wlist)

    return [(results[2 * b], results[2 * b + 1]) for b in range(nb)]


# ---------------------------------------------------------------------------
# Standalone AAD wrapper (NHWC).
# ---------------------------------------------------------------------------
def aad_nhwc(h_in, a1, a2, aad_params, *, tile_hw=None, io_dtype=None,
             matmul_dtype=None):
    """AAD forward on NHWC tensors.  Returns (h_out NHWC, M NHWC[..., 1])."""
    N, H, W, h_nc = h_in.shape
    HW = H * W
    io = jnp.dtype(io_dtype) if io_dtype is not None else jnp.dtype(h_in.dtype)
    mm = jnp.dtype(matmul_dtype) if matmul_dtype is not None else io
    vmem_limit = _vmem_limit_bytes()
    align = 8 * max(1, 4 // io.itemsize)      # bf16 packs two rows per sublane
    if tile_hw is None:
        tile_hw = _auto_tile_target(HW, h_nc, a1.shape[-1], a2.shape[-1], 1,
                                    io.itemsize, jnp.dtype(mm).itemsize, vmem_limit)
    thw, hw_pad = _plan_tiles(HW, tile_hw, align)
    pad = hw_pad - HW

    h_rows = _rows(h_in, io, pad)
    a1_rows = _rows(a1, io, pad)
    a2_rows = _rows(a2, io, pad)

    [(ho, m)] = _aad_rows(h_rows, a1_rows, a2_rows, [aad_params], h_nc=h_nc,
                          thw=thw, hw=HW, hw_pad=hw_pad, io=io, mm=mm,
                          vmem_limit=vmem_limit)
    if pad:
        ho = ho[:, :HW]
        m = m[:, :HW]
    return ho.reshape(N, H, W, h_nc), m.reshape(N, H, W, 1)


# ---------------------------------------------------------------------------
# 3x3 conv (kept on XLA's MXU conv, no f32 bounce).
# ---------------------------------------------------------------------------
def _conv3x3_nhwc(x, w_hwio, b, out_dtype):
    # TODO(synk): the 3x3 spectral_norm convolutions (conv_1/conv_2/conv_s) are
    # dispatched to XLA's native conv; spectral_norm itself is a weight
    # reparameterization (W / sigma(W)) handled at parameter-prep time.
    y = jax.lax.conv_general_dilated(
        x, w_hwio.astype(x.dtype),
        window_strides=(1, 1), padding="SAME",
        dimension_numbers=("NHWC", "HWIO", "NHWC"),
        preferred_element_type=jnp.float32)
    return (y + b.astype(jnp.float32).reshape(1, 1, 1, -1)).astype(out_dtype)


# ---------------------------------------------------------------------------
# AADResnetBlock forward (NHWC).
# ---------------------------------------------------------------------------
def aad_resnet_block_nhwc(inp, a1, a2, params, *, tile_hw=None, io_dtype=None,
                          matmul_dtype=None):
    """AADResnetBlock forward on NHWC tensors.  Returns (out NHWC, [M, ...])."""
    io = jnp.dtype(io_dtype) if io_dtype is not None else jnp.dtype(inp.dtype)
    mm = jnp.dtype(matmul_dtype) if matmul_dtype is not None else io
    N, H, W, inp_nc = inp.shape
    HW = H * W
    a1_nc, a2_nc = a1.shape[-1], a2.shape[-1]
    learned_shortcut = "aads" in params
    mid_nc = params["conv1_w"].shape[-1]
    vmem_limit = _vmem_limit_bytes()

    align = 8 * max(1, 4 // io.itemsize)
    if tile_hw is None:
        nb_max = 2 if learned_shortcut else 1
        tile_hw = _auto_tile_target(HW, max(inp_nc, mid_nc), a1_nc, a2_nc, nb_max,
                                    io.itemsize, jnp.dtype(mm).itemsize, vmem_limit)
    thw, hw_pad = _plan_tiles(HW, tile_hw, align)
    pad = hw_pad - HW

    # Hoisted: a1/a2 are converted + padded ONCE and reused by every AAD call.
    a1_rows = _rows(a1, io, pad)
    a2_rows = _rows(a2, io, pad)

    def run_aad(h_nhwc, branch_keys):
        h_nc = h_nhwc.shape[-1]
        h_rows = _rows(h_nhwc, io, pad)
        outs = _aad_rows(h_rows, a1_rows, a2_rows,
                         [params[k] for k in branch_keys], h_nc=h_nc,
                         thw=thw, hw=HW, hw_pad=hw_pad, io=io, mm=mm,
                         vmem_limit=vmem_limit)

        def unrows(r, c):
            if pad:
                r = r[:, :HW]
            return r.reshape(N, H, W, c)

        return [(unrows(ho, h_nc), unrows(m, 1)) for (ho, m) in outs]

    # Main-path AAD_1 fused with the learned-shortcut AAD_s (shared stats + a1/a2).
    if learned_shortcut:
        (x1, m1), (xs, ms) = run_aad(inp, ["aad1", "aads"])
    else:
        [(x1, m1)] = run_aad(inp, ["aad1"])
        xs = ms = None

    x = _conv3x3_nhwc(jax.nn.relu(x1), params["conv1_w"], params["conv1_b"], io)
    [(x2, m2)] = run_aad(x, ["aad2"])
    x = _conv3x3_nhwc(jax.nn.relu(x2), params["conv2_w"], params["conv2_b"], io)
    m_list = [m1, m2]

    if learned_shortcut:
        s = _conv3x3_nhwc(jax.nn.relu(xs), params["convs_w"], params["convs_b"], io)
        m_list.append(ms)
    else:
        s = inp.astype(io)

    return x + s, m_list


def aad_resnet_block_nchw(inp, a1, a2, params, **kwargs):
    """PyTorch-layout wrapper: NCHW<->NHWC conversion happens once at the block
    boundary; all intermediates stay NHWC (channels on the TPU lane axis)."""
    to_nhwc = lambda x: jnp.transpose(x, (0, 2, 3, 1))
    to_nchw = lambda x: jnp.transpose(x, (0, 3, 1, 2))
    out, m_list = aad_resnet_block_nhwc(
        to_nhwc(inp), to_nhwc(a1), to_nhwc(a2), params, **kwargs)
    return to_nchw(out), [to_nchw(m) for m in m_list]


# ---------------------------------------------------------------------------
# Synthetic parameters + pure-JAX references.
# ---------------------------------------------------------------------------
def make_aad_params(key, h_nc, a1_nc, a2_nc):
    """AAD params: 1x1-conv weights as (Cin, Cout), biases as (1, Cout)."""
    ks = jax.random.split(key, 10)
    u = lambda k, shape, s: jax.random.uniform(k, shape, jnp.float32, minval=-s, maxval=s)
    return (u(ks[0], (h_nc, 1), 0.3), u(ks[1], (1, 1), 0.1),          # conv_h
            u(ks[2], (a1_nc, h_nc), 0.3), u(ks[3], (1, h_nc), 0.1),   # conv_a1_gamma
            u(ks[4], (a1_nc, h_nc), 0.3), u(ks[5], (1, h_nc), 0.1),   # conv_a1_beta
            u(ks[6], (a2_nc, h_nc), 0.3), u(ks[7], (1, h_nc), 0.1),   # conv_a2_gamma
            u(ks[8], (a2_nc, h_nc), 0.3), u(ks[9], (1, h_nc), 0.1))   # conv_a2_beta


def make_block_params(key, inp_nc, out_nc, a1_nc, a2_nc):
    mid_nc = min(inp_nc, out_nc)
    ks = jax.random.split(key, 9)
    u = lambda k, shape, s: jax.random.uniform(k, shape, jnp.float32, minval=-s, maxval=s)
    conv_w = lambda k, cin, cout: u(k, (3, 3, cin, cout), 1.0 / (3.0 * (cin ** 0.5)))
    params = {
        "aad1": make_aad_params(ks[0], inp_nc, a1_nc, a2_nc),
        "conv1_w": conv_w(ks[1], inp_nc, mid_nc),
        "conv1_b": u(ks[2], (mid_nc,), 0.05),
        "aad2": make_aad_params(ks[3], mid_nc, a1_nc, a2_nc),
        "conv2_w": conv_w(ks[4], mid_nc, out_nc),
        "conv2_b": u(ks[5], (out_nc,), 0.05),
    }
    if inp_nc != out_nc:  # learned shortcut
        params["aads"] = make_aad_params(ks[6], inp_nc, a1_nc, a2_nc)
        params["convs_w"] = conv_w(ks[7], inp_nc, out_nc)
        params["convs_b"] = u(ks[8], (out_nc,), 0.05)
    return params


def aad_reference_nhwc(h_in, a1, a2, aad_params):
    (w_h, b_h, w_a1g, b_a1g, w_a1b, b_a1b, w_a2g, b_a2g, w_a2b, b_a2b) = aad_params
    x = h_in.astype(jnp.float32)
    mean = jnp.mean(x, axis=(1, 2), keepdims=True)
    var = jnp.mean((x - mean) ** 2, axis=(1, 2), keepdims=True)
    h = (x - mean) / jnp.sqrt(var + _EPS)
    lin = lambda t, w, b: (jnp.einsum("nhwc,cd->nhwd", t.astype(jnp.float32), w)
                           + b.reshape(1, 1, 1, -1))
    g1, b1 = lin(a1, w_a1g, b_a1g), lin(a1, w_a1b, b_a1b)
    g2, b2 = lin(a2, w_a2g, b_a2g), lin(a2, w_a2b, b_a2b)
    A1 = (g1 + 1.0) * h + b1
    A2 = (g2 + 1.0) * h + b2
    M = jax.nn.sigmoid(lin(h, w_h, b_h))
    return (1.0 - M) * A1 + M * A2, M


def aad_resnet_block_reference_nhwc(inp, a1, a2, params):
    conv = lambda x, w, b: _conv3x3_nhwc(x.astype(jnp.float32), w, b, jnp.float32)
    x, m1 = aad_reference_nhwc(inp, a1, a2, params["aad1"])
    x = conv(jax.nn.relu(x), params["conv1_w"], params["conv1_b"])
    x, m2 = aad_reference_nhwc(x, a1, a2, params["aad2"])
    x = conv(jax.nn.relu(x), params["conv2_w"], params["conv2_b"])
    m_list = [m1, m2]
    if "aads" in params:
        s, ms = aad_reference_nhwc(inp, a1, a2, params["aads"])
        s = conv(jax.nn.relu(s), params["convs_w"], params["convs_b"])
        m_list.append(ms)
    else:
        s = inp.astype(jnp.float32)
    return x + s, m_list


if __name__ == "__main__":
    N, H, W = 2, 16, 16
    inp_nc, out_nc, a1_nc, a2_nc = 32, 64, 16, 24  # inp_nc != out_nc -> learned shortcut
    key = jax.random.PRNGKey(0)
    k_inp, k_a1, k_a2, k_p = jax.random.split(key, 4)

    # PyTorch-convention NCHW inputs.
    inp = jax.random.normal(k_inp, (N, inp_nc, H, W), jnp.float32)
    a1 = jax.random.normal(k_a1, (N, a1_nc, H, W), jnp.float32)
    a2 = jax.random.normal(k_a2, (N, a2_nc, H, W), jnp.float32)
    params = make_block_params(k_p, inp_nc, out_nc, a1_nc, a2_nc)

    to_nhwc = lambda x: jnp.transpose(x, (0, 2, 3, 1))
    to_nchw = lambda x: jnp.transpose(x, (0, 3, 1, 2))
    inp_nhwc, a1_nhwc, a2_nhwc = to_nhwc(inp), to_nhwc(a1), to_nhwc(a2)

    # ---- standalone AAD (f32 I/O, 4 HW tiles -> exercises the tiled reduction) ----
    h_out, mask = aad_nhwc(inp_nhwc, a1_nhwc, a2_nhwc, params["aad1"], tile_hw=64)
    jax.block_until_ready((h_out, mask))
    h_ref, m_ref = aad_reference_nhwc(inp_nhwc, a1_nhwc, a2_nhwc, params["aad1"])
    assert jnp.allclose(h_out, h_ref, atol=1e-4, rtol=1e-4), "AAD h_out mismatch (f32)"
    assert jnp.allclose(mask, m_ref, atol=1e-5, rtol=1e-4), "AAD mask mismatch (f32)"

    # ---- padded-HW path: H*W=100 has no aligned tile divisor ----
    Hp = Wp = 10
    kp1, kp2, kp3 = jax.random.split(jax.random.PRNGKey(1), 3)
    hp = jax.random.normal(kp1, (N, Hp, Wp, inp_nc), jnp.float32)
    a1p = jax.random.normal(kp2, (N, Hp, Wp, a1_nc), jnp.float32)
    a2p = jax.random.normal(kp3, (N, Hp, Wp, a2_nc), jnp.float32)
    hp_out, mp_out = aad_nhwc(hp, a1p, a2p, params["aad1"], tile_hw=64)
    jax.block_until_ready((hp_out, mp_out))
    hp_ref, mp_ref = aad_reference_nhwc(hp, a1p, a2p, params["aad1"])
    assert jnp.allclose(hp_out, hp_ref, atol=1e-4, rtol=1e-4), "AAD h_out mismatch (padded)"
    assert jnp.allclose(mp_out, mp_ref, atol=1e-5, rtol=1e-4), "AAD mask mismatch (padded)"

    # ---- bf16 HBM I/O path (v6e/v7x); stats/mask/blend stay f32 ----
    h_bf, m_bf = aad_nhwc(inp_nhwc, a1_nhwc, a2_nhwc, params["aad1"],
                          tile_hw=64, io_dtype=jnp.bfloat16)
    jax.block_until_ready((h_bf, m_bf))
    assert h_bf.dtype == jnp.bfloat16
    assert jnp.allclose(h_bf.astype(jnp.float32), h_ref, atol=0.25, rtol=0.1), \
        "AAD h_out mismatch (bf16 I/O)"

    # ---- f32 I/O with bf16 MXU inputs (v5e knob); f32 accumulation ----
    h_mm, m_mm = aad_nhwc(inp_nhwc, a1_nhwc, a2_nhwc, params["aad1"],
                          tile_hw=64, matmul_dtype=jnp.bfloat16)
    jax.block_until_ready((h_mm, m_mm))
    assert jnp.allclose(h_mm, h_ref, atol=0.2, rtol=0.1), "AAD h_out mismatch (bf16 MXU)"
    assert jnp.allclose(m_mm, m_ref, atol=1e-5, rtol=1e-4), "AAD mask mismatch (bf16 MXU)"

    # ---- full block: main-path + shortcut AAD fused into one kernel pair ----
    out, m_list = aad_resnet_block_nchw(inp, a1, a2, params, tile_hw=64)
    jax.block_until_ready((out, m_list))
    out_ref_nhwc, m_list_ref = aad_resnet_block_reference_nhwc(
        inp_nhwc, a1_nhwc, a2_nhwc, params)
    assert out.shape == (N, out_nc, H, W)
    assert len(m_list) == 3
    assert jnp.allclose(out, to_nchw(out_ref_nhwc), atol=1e-3, rtol=1e-3), \
        "block output mismatch"
    for m_k, m_r in zip(m_list, m_list_ref):
        assert jnp.allclose(m_k, to_nchw(m_r), atol=1e-4, rtol=1e-4), "block mask mismatch"

    # ---- full block end-to-end bf16 (activations AND 3x3 convs in bf16) ----
    out_bf, _ = aad_resnet_block_nchw(inp, a1, a2, params, tile_hw=64,
                                      io_dtype=jnp.bfloat16)
    jax.block_until_ready(out_bf)
    assert out_bf.dtype == jnp.bfloat16
    diff = jnp.abs(out_bf.astype(jnp.float32) - to_nchw(out_ref_nhwc))
    assert bool(jnp.all(jnp.isfinite(diff))) and float(jnp.max(diff)) < 0.75, \
        "block output mismatch (bf16 end-to-end)"

    # ---- identity-shortcut block (inp_nc == out_nc) with auto tile sizing ----
    params_id = make_block_params(jax.random.PRNGKey(2), inp_nc, inp_nc, a1_nc, a2_nc)
    out_id, m_id = aad_resnet_block_nchw(inp, a1, a2, params_id)
    jax.block_until_ready((out_id, m_id))
    out_id_ref, m_id_ref = aad_resnet_block_reference_nhwc(
        inp_nhwc, a1_nhwc, a2_nhwc, params_id)
    assert len(m_id) == 2
    assert jnp.allclose(out_id, to_nchw(out_id_ref), atol=1e-3, rtol=1e-3), \
        "identity-shortcut block output mismatch"

    print("KERNEL_OK")
</pallas_src>

<mosaic_0001>
module attributes {stable_mosaic.version = 11 : i64} {
  func.func @_in_stats_kernel(%arg0: i32, %arg1: i32, %arg2: memref<1x64x32xf32, #tpu.memory_space<vmem>>, %arg3: memref<1x1x32xf32, #tpu.memory_space<vmem>>, %arg4: memref<1x1x32xf32, #tpu.memory_space<vmem>>, %arg5: memref<1x32xf32, #tpu.memory_space<vmem>>, %arg6: memref<1x32xf32, #tpu.memory_space<vmem>>, %arg7: memref<1x32xf32, #tpu.memory_space<vmem>>) attributes {dimension_semantics = [#tpu.dimension_semantics<parallel>, #tpu.dimension_semantics<arbitrary>], iteration_bounds = array<i64: 2, 4>, scalar_prefetch = 0 : i64, scratch_operands = 3 : i64, tpu.core_type = #tpu.core_type<tc>, window_params = [{transform_indices = @transform_0, window_bounds = array<i64: 1, 64, 32>}, {transform_indices = @transform_1, window_bounds = array<i64: 1, 1, 32>}, {transform_indices = @transform_2, window_bounds = array<i64: 1, 1, 32>}]} {
    %c0 = arith.constant 0 : index
    %c0_0 = arith.constant 0 : index
    %c0_1 = arith.constant 0 : index
    %0 = vector.load %arg2[%c0, %c0_0, %c0_1] : memref<1x64x32xf32, #tpu.memory_space<vmem>>, vector<1x64x32xf32>
    %1 = vector.shape_cast %0 : vector<1x64x32xf32> to vector<64x32xf32>
    %c0_i32 = arith.constant 0 : i32
    %2 = arith.cmpi eq, %arg1, %c0_i32 : i32
    %3 = arith.extui %2 : i1 to i32
    %c0_i32_2 = arith.constant 0 : i32
    %4 = arith.cmpi ne, %3, %c0_i32_2 : i32
    scf.if %4 {
      %22 = vector.extract_strided_slice %1 {offsets = [0, 0], sizes = [1, 32], strides = [1, 1]} : vector<64x32xf32> to vector<1x32xf32>
      %c0_15 = arith.constant 0 : index
      %c0_16 = arith.constant 0 : index
      %23 = vector.load %arg5[%c0_15, %c0_16] : memref<1x32xf32, #tpu.memory_space<vmem>>, vector<1x32xf32>
      tpu.vector_store %arg5[%c0_15, %c0_16], %22 {strides = array<i32>} : memref<1x32xf32, #tpu.memory_space<vmem>>, vector<1x32xf32>,
      %cst_17 = arith.constant 0.000000e+00 : f32
      %24 = vector.broadcast %cst_17 : f32 to vector<1x32xf32>
      %c0_18 = arith.constant 0 : index
      %c0_19 = arith.constant 0 : index
      %25 = vector.load %arg6[%c0_18, %c0_19] : memref<1x32xf32, #tpu.memory_space<vmem>>, vector<1x32xf32>
      tpu.vector_store %arg6[%c0_18, %c0_19], %24 {strides = array<i32>} : memref<1x32xf32, #tpu.memory_space<vmem>>, vector<1x32xf32>,
      %cst_20 = arith.constant 0.000000e+00 : f32
      %26 = vector.broadcast %cst_20 : f32 to vector<1x32xf32>
      %c0_21 = arith.constant 0 : index
      %c0_22 = arith.constant 0 : index
      %27 = vector.load %arg7[%c0_21, %c0_22] : memref<1x32xf32, #tpu.memory_space<vmem>>, vector<1x32xf32>
      tpu.vector_store %arg7[%c0_21, %c0_22], %26 {strides = array<i32>} : memref<1x32xf32, #tpu.memory_space<vmem>>, vector<1x32xf32>,
    } else {
    }
    %c0_3 = arith.constant 0 : index
    %c0_4 = arith.constant 0 : index
    %5 = vector.load %arg5[%c0_3, %c0_4] : memref<1x32xf32, #tpu.memory_space<vmem>>, vector<1x32xf32>
    %6 = vector.broadcast %5 : vector<1x32xf32> to vector<64x32xf32>
    %7 = arith.subf %1, %6 : vector<64x32xf32>
    %c0_5 = arith.constant 0 : index
    %c0_6 = arith.constant 0 : index
    %8 = vector.load %arg6[%c0_5, %c0_6] : memref<1x32xf32, #tpu.memory_space<vmem>>, vector<1x32xf32>
    %cst = arith.constant dense<0.000000e+00> : vector<32xf32>
    %9 = vector.multi_reduction <add>, %7, %cst [0] : vector<64x32xf32> to vector<32xf32>
    %10 = vector.shape_cast %9 : vector<32xf32> to vector<1x32xf32>
    %11 = arith.addf %8, %10 : vector<1x32xf32>
    %c0_7 = arith.constant 0 : index
    %c0_8 = arith.constant 0 : index
    %12 = vector.load %arg6[%c0_7, %c0_8] : memref<1x32xf32, #tpu.memory_space<vmem>>, vector<1x32xf32>
    tpu.vector_store %arg6[%c0_7, %c0_8], %11 {strides = array<i32>} : memref<1x32xf32, #tpu.memory_space<vmem>>, vector<1x32xf32>,
    %c0_9 = arith.constant 0 : index
    %c0_10 = arith.constant 0 : index
    %13 = vector.load %arg7[%c0_9, %c0_10] : memref<1x32xf32, #tpu.memory_space<vmem>>, vector<1x32xf32>
    %14 = arith.mulf %7, %7 : vector<64x32xf32>
    %cst_11 = arith.constant dense<0.000000e+00> : vector<32xf32>
    %15 = vector.multi_reduction <add>, %14, %cst_11 [0] : vector<64x32xf32> to vector<32xf32>
    %16 = vector.shape_cast %15 : vector<32xf32> to vector<1x32xf32>
    %17 = arith.addf %13, %16 : vector<1x32xf32>
    %c0_12 = arith.constant 0 : index
    %c0_13 = arith.constant 0 : index
    %18 = vector.load %arg7[%c0_12, %c0_13] : memref<1x32xf32, #tpu.memory_space<vmem>>, vector<1x32xf32>
    tpu.vector_store %arg7[%c0_12, %c0_13], %17 {strides = array<i32>} : memref<1x32xf32, #tpu.memory_space<vmem>>, vector<1x32xf32>,
    %c3_i32 = arith.constant 3 : i32
    %19 = arith.cmpi eq, %arg1, %c3_i32 : i32
    %20 = arith.extui %19 : i1 to i32
    %c0_i32_14 = arith.constant 0 : i32
    %21 = arith.cmpi ne, %20, %c0_i32_14 : i32
    scf.if %21 {
      %c0_15 = arith.constant 0 : index
      %c0_16 = arith.constant 0 : index
      %22 = vector.load %arg5[%c0_15, %c0_16] : memref<1x32xf32, #tpu.memory_space<vmem>>, vector<1x32xf32>
      %c0_17 = arith.constant 0 : index
      %c0_18 = arith.constant 0 : index
      %23 = vector.load %arg6[%c0_17, %c0_18] : memref<1x32xf32, #tpu.memory_space<vmem>>, vector<1x32xf32>
      %c0_19 = arith.constant 0 : index
      %c0_20 = arith.constant 0 : index
      %24 = vector.load %arg7[%c0_19, %c0_20] : memref<1x32xf32, #tpu.memory_space<vmem>>, vector<1x32xf32>
      %cst_21 = arith.constant 3.906250e-03 : f32
      %25 = vector.broadcast %cst_21 : f32 to vector<1x32xf32>
      %26 = arith.mulf %23, %25 : vector<1x32xf32>
      %cst_22 = arith.constant 3.906250e-03 : f32
      %27 = vector.broadcast %cst_22 : f32 to vector<1x32xf32>
      %28 = arith.mulf %24, %27 : vector<1x32xf32>
      %29 = arith.mulf %26, %26 : vector<1x32xf32>
      %30 = arith.subf %28, %29 : vector<1x32xf32>
      %cst_23 = arith.constant 0.000000e+00 : f32
      %31 = vector.broadcast %cst_23 : f32 to vector<1x32xf32>
      %32 = arith.maximumf %30, %31 : vector<1x32xf32>
      %33 = arith.addf %22, %26 : vector<1x32xf32>
      %c0_24 = arith.constant 0 : index
      %c0_25 = arith.constant 0 : index
      %c0_26 = arith.constant 0 : index
      %34 = vector.load %arg3[%c0_24, %c0_25, %c0_26] : memref<1x1x32xf32, #tpu.memory_space<vmem>>, vector<1x1x32xf32>
      %35 = vector.shape_cast %34 : vector<1x1x32xf32> to vector<1x32xf32>
      %36 = vector.shape_cast %33 : vector<1x32xf32> to vector<1x1x32xf32>
      tpu.vector_store %arg3[%c0_24, %c0_25, %c0_26], %36 {strides = array<i32>} : memref<1x1x32xf32, #tpu.memory_space<vmem>>, vector<1x1x32xf32>,
      %cst_27 = arith.constant 9.99999974E-6 : f32
      %37 = vector.broadcast %cst_27 : f32 to vector<1x32xf32>
      %38 = arith.addf %32, %37 : vector<1x32xf32>
      %39 = math.rsqrt %38 : vector<1x32xf32>
      %c0_28 = arith.constant 0 : index
      %c0_29 = arith.constant 0 : index
      %c0_30 = arith.constant 0 : index
      %40 = vector.load %arg4[%c0_28, %c0_29, %c0_30] : memref<1x1x32xf32, #tpu.memory_space<vmem>>, vector<1x1x32xf32>
      %41 = vector.shape_cast %40 : vector<1x1x32xf32> to vector<1x32xf32>
      %42 = vector.shape_cast %39 : vector<1x32xf32> to vector<1x1x32xf32>
      tpu.vector_store %arg4[%c0_28, %c0_29, %c0_30], %42 {strides = array<i32>} : memref<1x1x32xf32, #tpu.memory_space<vmem>>, vector<1x1x32xf32>,
    } else {
    }
    return
  }
  func.func @transform_0(%arg0: i32, %arg1: i32) -> (i32, i32, i32) {
    %c0_i32 = arith.constant 0 : i32
    %c0_i32_0 = arith.constant 0 : i32
    return %arg0, %arg1, %c0_i32 : i32, i32, i32
  }
  func.func @transform_1(%arg0: i32, %arg1: i32) -> (i32, i32, i32) {
    %c0_i32 = arith.constant 0 : i32
    %c0_i32_0 = arith.constant 0 : i32
    %c0_i32_1 = arith.constant 0 : i32
    return %arg0, %c0_i32, %c0_i32_0 : i32, i32, i32
  }
  func.func @transform_2(%arg0: i32, %arg1: i32) -> (i32, i32, i32) {
    %c0_i32 = arith.constant 0 : i32
    %c0_i32_0 = arith.constant 0 : i32
    %c0_i32_1 = arith.constant 0 : i32
    return %arg0, %c0_i32, %c0_i32_0 : i32, i32, i32
  }
}

</mosaic_0001>

<llo_original>
// kernel: tpu_custom_call.1
$region0: #{tpu_custom_call.1}
  #allocation0 [shape = 'u32[]', space=smem, size = 0x4, offset = 0x4, fixed_abs, tag = 'smem constant byte address 0x4 - core index']
  #allocation1 [shape = 'u32[72,128]{1,0:T(1,128)}', space=vmem, size = 0x9000, scoped, tag = 'internal scratch']
  #allocation2 [shape = 'f32[1,32]{1,0:T(1,128)}', space=vmem, size = 0x200, scoped, tag = 'scratch operand']
  #allocation3 [shape = 'f32[1,32]{1,0:T(1,128)}', space=vmem, size = 0x200, scoped, tag = 'scratch operand']
  #allocation4 [shape = 'f32[1,32]{1,0:T(1,128)}', space=vmem, size = 0x200, scoped, tag = 'scratch operand']
  %s0 = inlined_call_operand.vmem [shape: f32[2,256,32], index: 0, kind: input, shape index: {}]
  %s1 = inlined_call_operand.hbm [shape: f32[2,1,32], index: 1, kind: output, shape index: {0}]
  %s2 = inlined_call_operand.hbm [shape: f32[2,1,32], index: 2, kind: output, shape index: {1}]
  %3 = xla_tuple %s1, %s2
  %s4 = sld [smem:[#allocation0]]
  $region53: #{tpu_custom_call.1} parent=0
    _
  %s6 = ssub.s32 1, %s4
  %s7 = scalar_select 0, %s6, %s4
  $region1: #{tpu_custom_call.1} parent=0
    #allocation5 [shape = 'u8[1024]{0}', space=vmem, size = 0x400, scoped, tag = 'output window, operand 0']
    #allocation6 [shape = 's32[2]{0}', space=sflag, size = 0x8, scoped, tag = 'scoped memory for tpu_custom_call.1']
    #allocation7 [shape = 'u8[1024]{0}', space=vmem, size = 0x400, scoped, tag = 'output window, operand 1']
    #allocation8 [shape = 's32[2]{0}', space=sflag, size = 0x8, scoped, tag = 'scoped memory for tpu_custom_call.1']
    %8 = vsyncpa [#allocation6], 0
    %s9 = scalar_lea.sflag [#allocation6], 1
    %10 = vsyncpa %s9, 0
    %11 = vsyncpa [#allocation8], 0
    %s12 = scalar_lea.sflag [#allocation8], 1
    %13 = vsyncpa %s12, 0
    loop: start=0, step=1, limit=10
    $region2: #{tpu_custom_call.1} parent=1 // loop_pre_header
      _
    $region3: #{tpu_custom_call.1} parent=1 // loop_header
      %s15 = sphi 0, %s19
      %p16 = scmp.ge.s32.totalorder %s15, 10
      %s22 = sphi 0, %s34
      %s23 = sphi 0, %s30
      %s24 = sphi 0, %s22
      %s25 = sphi 0, %s23
      %s26 = sphi 0, %s24
      %s27 = sphi 0, %s25
      %s39 = sphi 0, %s41
      %s42 = sphi 0, %s39
      %s43 = sphi 0, %s42
      %s59 = sphi 0, %s43
      %s65 = sphi 0, %s67
      %s68 = sphi 0, %s65
      %s69 = sphi 0, %s68
      %s85 = sphi 0, %s69
      %s91 = sphi 0, %s93
      %s94 = sphi 0, %s91
      %s95 = sphi 0, %s94
      %s111 = sphi 0, %s95
    $region4: #{tpu_custom_call.1} parent=1 // loop_header_branch
      %18 = sbr.rel (%p16) target = $region8
    $region5: #{tpu_custom_call.1} parent=1 // loop_body
      %s20 = ssub.s32 %s15, 1
      %s21 = ssub.s32 %s15, 2
      %s28 = sadd.s32 1, %s23
      %p29 = scmp.ge.s32.totalorder %s28, 4
      %s30 = scalar_select %p29, 0, %s28
      %s31 = sadd.s32 1, %s22
      %s32 = scalar_select %p29, %s31, %s22
      %p33 = scmp.ge.s32.totalorder %s32, 2
      %s34 = scalar_select %p33, 0, %s32
      %s35 = ssub.s32 %s22, %s34
      %s36 = ssub.s32 %s23, %s30
      %s37 = sor.u32 %s35, %s36
      %p38 = scmp.eq.s32.totalorder %s37, 0
      %s40 = sadd.s32 %s39, 1
      %s41 = scalar_select %p38, %s39, %s40
      %p44 = pneg %p38
      %p45 = scmp.eq.s32.totalorder %s15, 7
      %p46 = por %p44, %p45
      %p47 = scmp.ne.s32.totalorder %s39, %s42
      %p48 = scmp.eq.s32.totalorder %s15, 0
      %p49 = por %p47, %p48
      %p50 = scmp.ne.s32.totalorder %s39, %s42
      %p51 = scmp.eq.s32.totalorder %s20, 7
      %p52 = por %p50, %p51
      %p53 = scmp.ne.s32.totalorder %s42, %s43
      %p54 = scmp.eq.s32.totalorder %s20, 0
      %p55 = por %p53, %p54
      %p56 = scmp.ne.s32.totalorder %s42, %s43
      %p57 = scmp.eq.s32.totalorder %s21, 7
      %p58 = por %p56, %p57
      %p60 = scmp.ne.s32.totalorder %s43, %s59
      %p61 = scmp.eq.s32.totalorder %s21, 0
      %p62 = por %p60, %p61
      %s63 = ssub.s32 %s22, %s34
      %p64 = scmp.eq.s32.totalorder %s63, 0
      %s66 = sadd.s32 %s65, 1
      %s67 = scalar_select %p64, %s65, %s66
      %p70 = pneg %p64
      %p71 = scmp.eq.s32.totalorder %s15, 7
      %p72 = por %p70, %p71
      %p73 = scmp.ne.s32.totalorder %s65, %s68
      %p74 = scmp.eq.s32.totalorder %s15, 0
      %p75 = por %p73, %p74
      %p76 = scmp.ne.s32.totalorder %s65, %s68
      %p77 = scmp.eq.s32.totalorder %s20, 7
      %p78 = por %p76, %p77
      %p79 = scmp.ne.s32.totalorder %s68, %s69
      %p80 = scmp.eq.s32.totalorder %s20, 0
      %p81 = por %p79, %p80
      %p82 = scmp.ne.s32.totalorder %s68, %s69
      %p83 = scmp.eq.s32.totalorder %s21, 7
      %p84 = por %p82, %p83
      %p86 = scmp.ne.s32.totalorder %s69, %s85
      %p87 = scmp.eq.s32.totalorder %s21, 0
      %p88 = por %p86, %p87
      %s89 = ssub.s32 %s22, %s34
      %p90 = scmp.eq.s32.totalorder %s89, 0
      %s92 = sadd.s32 %s91, 1
      %s93 = scalar_select %p90, %s91, %s92
      %p96 = pneg %p90
      %p97 = scmp.eq.s32.totalorder %s15, 7
      %p98 = por %p96, %p97
      %p99 = scmp.ne.s32.totalorder %s91, %s94
      %p100 = scmp.eq.s32.totalorder %s15, 0
      %p101 = por %p99, %p100
      %p102 = scmp.ne.s32.totalorder %s91, %s94
      %p103 = scmp.eq.s32.totalorder %s20, 7
      %p104 = por %p102, %p103
      %p105 = scmp.ne.s32.totalorder %s94, %s95
      %p106 = scmp.eq.s32.totalorder %s20, 0
      %p107 = por %p105, %p106
      %p108 = scmp.ne.s32.totalorder %s94, %s95
      %p109 = scmp.eq.s32.totalorder %s21, 7
      %p110 = por %p108, %p109
      %p112 = scmp.ne.s32.totalorder %s95, %s111
      %p113 = scmp.eq.s32.totalorder %s21, 0
      %p114 = por %p112, %p113
      %p115 = scmp.le.s32.totalorder 1, %s15
      %p116 = scmp.lt.s32.totalorder %s15, 9
      %p117 = pnand %p115, %p116
      %p118 = pneg %p117
      // Predicated region
      $region9: #{tpu_custom_call.1} parent=5 // pred_check
        _
      $region10: #{tpu_custom_call.1} parent=5 // pred_check_branch
        %120 = sbr.rel (%p117) target = $region12
      $region11: #{tpu_custom_call.1} parent=5 // pred_region
        %s121 = ssub.s32 %s15, 1
      $region12: #{tpu_custom_call.1} parent=5 // pred_fallthru
        _
      %p122 = scmp.lt.s32.totalorder %s15, 8
      // Predicated region
      $region13: #{tpu_custom_call.1} parent=5 // pred_check
        %p123 = pneg %p122
      $region14: #{tpu_custom_call.1} parent=5 // pred_check_branch
        %125 = sbr.rel (%p123) target = $region16
      $region15: #{tpu_custom_call.1} parent=5 // pred_region
        // Predicated region
        $region17: #{tpu_custom_call.1} parent=15 // pred_check
          %p126 = pneg %p49
        $region18: #{tpu_custom_call.1} parent=15 // pred_check_branch
          %128 = sbr.rel (%p126) target = $region20
        $region19: #{tpu_custom_call.1} parent=15 // pred_region
          %s129 = smul.u32 8, %s23
          %p130 = scmp.lt.s32.totalorder %s22, 1
          %s131 = scalar_select %p130, %s22, 1
          %p132 = scmp.lt.s32.totalorder %s129, 31
          %s133 = scalar_select %p132, %s129, 31
          %s134 = smul.addr %s131, 32
          %s135 = sadd.s32 %s133, %s134
          %s136 = smul.addr %s135, 8
          %s137 = scalar_lea.vmem %s0, %s136
          %s138 = smul.u32 8, %s23
        $region20: #{tpu_custom_call.1} parent=15 // pred_fallthru
          _
      $region16: #{tpu_custom_call.1} parent=5 // pred_fallthru
        _
      %p139 = scmp.le.s32.totalorder 1, %s15
      %p140 = scmp.lt.s32.totalorder %s15, 9
      %p141 = pnand %p139, %p140
      %p142 = pneg %p141
      // Predicated region
      $region21: #{tpu_custom_call.1} parent=5 // pred_check
        _
      $region22: #{tpu_custom_call.1} parent=5 // pred_check_branch
        %144 = sbr.rel (%p141) target = $region24
      $region23: #{tpu_custom_call.1} parent=5 // pred_region
        %s145 = ssub.s32 %s15, 1
        %s146 = smul.u32 8, %s25
        %p147 = scmp.lt.s32.totalorder %s24, 1
        %s148 = scalar_select %p147, %s24, 1
        %p149 = scmp.lt.s32.totalorder %s146, 31
        %s150 = scalar_select %p149, %s146, 31
        %s151 = smul.addr %s148, 32
        %s152 = sadd.s32 %s150, %s151
        %s153 = smul.addr %s152, 8
        %s154 = scalar_lea.vmem %s0, %s153
        %p155 = pneg %p55
        %p156 = pneg %p52
        %p157 = pneg %p81
        %p158 = pneg %p78
        %s159 = sand.u32 %s68, 1
        %s160 = scalar_lea.sflag [#allocation6], %s159
        %s161 = sand.u32 %s68, 1
        %s162 = scalar_lea.vmem [#allocation5], %s161
        %p163 = pneg %p107
        %p164 = pneg %p104
        %s165 = sand.u32 %s94, 1
        %s166 = scalar_lea.sflag [#allocation8], %s165
        %s167 = sand.u32 %s94, 1
        %s168 = scalar_lea.vmem [#allocation7], %s167
        %s169 = smul.u32 8, %s25
        %p170 = scmp.lt.s32.totalorder %s24, 1
        %s171 = scalar_select %p170, %s24, 1
        %p172 = scmp.lt.s32.totalorder %s169, 31
        %s173 = scalar_select %p172, %s169, 31
        %s174 = smul.addr %s171, 32
        %s175 = sadd.s32 %s173, %s174
        %s176 = smul.addr %s175, 8
        %s177 = scalar_lea.vmem %s0, %s176
        %s178 = smul.u32 8, %s25
        %v179 = vld [vmem:[%s177] sm:$0xff]
        %v180 = vld [vmem:[%s177 + $0x8] sm:$0xff]
        %v181 = vld [vmem:[%s177 + $0x10] sm:$0xff]
        %v182 = vld [vmem:[%s177 + $0x18] sm:$0xff]
        %v183 = vld [vmem:[%s177 + $0x20] sm:$0xff]
        %v184 = vld [vmem:[%s177 + $0x28] sm:$0xff]
        %v185 = vld [vmem:[%s177 + $0x30] sm:$0xff]
        %v186 = vld [vmem:[%s177 + $0x38] sm:$0xff]
        %p187 = scmp.eq.s32.totalorder %s25, 0
        // Predicated region
        $region25: #{tpu_custom_call.1} parent=23 // pred_check
          %p188 = pneg %p187
        $region26: #{tpu_custom_call.1} parent=23 // pred_check_branch
          %190 = sbr.rel (%p188) target = $region28
        $region27: #{tpu_custom_call.1} parent=23 // pred_region
          %vm191 = vcmask 253952
          %192 = vst.msk [vmem:[#allocation2] sm:$0x1] %vm191, %v179
          %193 = vst.msk [vmem:[#allocation3] sm:$0x1] %vm191, 0.0
          %194 = vst.msk [vmem:[#allocation4] sm:$0x1] %vm191, 0.0
        $region28: #{tpu_custom_call.1} parent=23 // pred_fallthru
          _
        %v195 = vld [vmem:[#allocation2] sm:$0x1]
        %v197 = vperm.slane %v195, 0
        %v199 = vsub.f32 %v179, %v197
        %v200 = vsub.f32 %v180, %v197
        %v201 = vsub.f32 %v181, %v197
        %v202 = vsub.f32 %v182, %v197
        %v203 = vsub.f32 %v183, %v197
        %v204 = vsub.f32 %v184, %v197
        %v205 = vsub.f32 %v185, %v197
        %v206 = vsub.f32 %v186, %v197
        %v207 = vld [vmem:[#allocation3] sm:$0x1]
        %vm208 = vcmask 261120
        %v209 = vsel %vm208, %v199, 0.0
        %v210 = vsel %vm208, %v200, 0.0
        %v211 = vadd.f32 %v209, %v210
        %v212 = vsel %vm208, %v201, 0.0
        %v213 = vadd.f32 %v211, %v212
        %v214 = vsel %vm208, %v202, 0.0
        %v215 = vadd.f32 %v213, %v214
        %v216 = vsel %vm208, %v203, 0.0
        %v217 = vadd.f32 %v215, %v216
        %v218 = vsel %vm208, %v204, 0.0
        %v219 = vadd.f32 %v217, %v218
        %v220 = vsel %vm208, %v205, 0.0
        %v221 = vadd.f32 %v219, %v220
        %v222 = vsel %vm208, %v206, 0.0
        %v223 = vadd.f32 %v221, %v222
        %v224 = vrot.slane %v223, 4
        %v225 = vadd.f32 %v223, %v224
        %v226 = vrot.slane %v225, 2
        %v227 = vadd.f32 %v225, %v226
        %v228 = vrot.slane %v227, 1
        %v229 = vadd.f32 %v227, %v228
        %v230 = vadd.f32 %v207, %v229
        %vm231 = vcmask 253952
        %232 = vst.msk [vmem:[#allocation3] sm:$0x1] %vm231, %v230
        %v233 = vld [vmem:[#allocation4] sm:$0x1]
        %v234 = vmul.f32 %v199, %v199
        %v235 = vmul.f32 %v200, %v200
        %v236 = vmul.f32 %v201, %v201
        %v237 = vmul.f32 %v202, %v202
        %v238 = vmul.f32 %v203, %v203
        %v239 = vmul.f32 %v204, %v204
        %v240 = vmul.f32 %v205, %v205
        %v241 = vmul.f32 %v206, %v206
        %v242 = vsel %vm208, %v234, 0.0
        %v243 = vsel %vm208, %v235, 0.0
        %v244 = vadd.f32 %v242, %v243
        %v245 = vsel %vm208, %v236, 0.0
        %v246 = vadd.f32 %v244, %v245
        %v247 = vsel %vm208, %v237, 0.0
        %v248 = vadd.f32 %v246, %v247
        %v249 = vsel %vm208, %v238, 0.0
        %v250 = vadd.f32 %v248, %v249
        %v251 = vsel %vm208, %v239, 0.0
        %v252 = vadd.f32 %v250, %v251
        %v253 = vsel %vm208, %v240, 0.0
        %v254 = vadd.f32 %v252, %v253
        %v255 = vsel %vm208, %v241, 0.0
        %v256 = vadd.f32 %v254, %v255
        %v257 = vrot.slane %v256, 4
        %v258 = vadd.f32 %v256, %v257
        %v259 = vrot.slane %v258, 2
        %v260 = vadd.f32 %v258, %v259
        %v261 = vrot.slane %v260, 1
        %v262 = vadd.f32 %v260, %v261
        %v263 = vadd.f32 %v233, %v262
        %264 = vst.msk [vmem:[#allocation4] sm:$0x1] %vm231, %v263
        %p265 = scmp.eq.s32.totalorder %s25, 3
        // Predicated region
        $region29: #{tpu_custom_call.1} parent=23 // pred_check
          %p266 = pneg %p265
        $region30: #{tpu_custom_call.1} parent=23 // pred_check_branch
          %268 = sbr.rel (%p266) target = $region32
        $region31: #{tpu_custom_call.1} parent=23 // pred_region
          %v269 = vld [vmem:[#allocation2] sm:$0x1]
          %v270 = vld [vmem:[#allocation3] sm:$0x1]
          %v271 = vld [vmem:[#allocation4] sm:$0x1]
          %v272 = vmul.f32 %v270, 0.00390625
          %v273 = vmul.f32 %v271, 0.00390625
          %v274 = vmul.f32 %v272, %v272
          %v275 = vsub.f32 %v273, %v274
          %v276 = vmax.f32 %v275, 0.0
          %v277 = vadd.f32 %v269, %v272
          %278 = vst.msk [vmem:[%s162] sm:$0x1] %vm231, %v277
          %v279 = vadd.f32 %v276, 1e-05
          %v280 = vrsqrt.pop %v279
          %v281 = vmul.f32 %v280, %v279
          %v282 = vmul.f32 %v281, %v280
          %v283 = vmul.f32 0.5, %v282
          %v284 = vsub.f32 1.5, %v283
          %v285 = vmul.f32 %v280, %v284
          %vm286 = vweird.f32 %v279
          %vm287 = vweird.f32 %v280
          %vm288 = vmor %vm286, %vm287
          %v289 = vsel %vm288, %v280, %v285
          %290 = vst.msk [vmem:[%s168] sm:$0x1] %vm231, %v289
        $region32: #{tpu_custom_call.1} parent=23 // pred_fallthru
          _
        %s291 = sand.u32 %s68, 1
        %s292 = scalar_lea.sflag [#allocation6], %s291
        %s293 = sand.u32 %s68, 1
        %s294 = scalar_lea.vmem [#allocation5], %s293
        %s295 = sand.u32 %s94, 1
        %s296 = scalar_lea.sflag [#allocation8], %s295
        %s297 = sand.u32 %s94, 1
        %s298 = scalar_lea.vmem [#allocation7], %s297
        // Predicated region
        $region33: #{tpu_custom_call.1} parent=23 // pred_check
          %p299 = pneg %p78
        $region34: #{tpu_custom_call.1} parent=23 // pred_check_branch
          %301 = sbr.rel (%p299) target = $region36
        $region35: #{tpu_custom_call.1} parent=23 // pred_region
          %303 = vsyncadd %s292, 0
          %s304 = scalar_lea.hbm %s1, %s24
          %s306 = sshll.u32 %s294, 4
          %s307 = int_to_ptr.vmem [resolvable:$true] %s306
          %s308 = sshll.u32 %s304, 4
          %s309 = int_to_ptr.hbm [resolvable:$true] %s308
          %311 = dma.vmem_to_hbm [thread:$0]  %s307, 16, %s309, %s292
        $region36: #{tpu_custom_call.1} parent=23 // pred_fallthru
          _
        // Predicated region
        $region37: #{tpu_custom_call.1} parent=23 // pred_check
          %p312 = pneg %p104
        $region38: #{tpu_custom_call.1} parent=23 // pred_check_branch
          %314 = sbr.rel (%p312) target = $region40
        $region39: #{tpu_custom_call.1} parent=23 // pred_region
          %316 = vsyncadd %s296, 0
          %s317 = scalar_lea.hbm %s2, %s24
          %s319 = sshll.u32 %s298, 4
          %s320 = int_to_ptr.vmem [resolvable:$true] %s319
          %s321 = sshll.u32 %s317, 4
          %s322 = int_to_ptr.hbm [resolvable:$true] %s321
          %324 = dma.vmem_to_hbm [thread:$0]  %s320, 16, %s322, %s296
        $region40: #{tpu_custom_call.1} parent=23 // pred_fallthru
          _
      $region24: #{tpu_custom_call.1} parent=5 // pred_fallthru
        _
      %p325 = scmp.le.s32.totalorder 2, %s15
      // Predicated region
      $region41: #{tpu_custom_call.1} parent=5 // pred_check
        %p326 = pneg %p325
      $region42: #{tpu_custom_call.1} parent=5 // pred_check_branch
        %328 = sbr.rel (%p326) target = $region44
      $region43: #{tpu_custom_call.1} parent=5 // pred_region
        %s329 = ssub.s32 %s15, 2
        // Predicated region
        $region45: #{tpu_custom_call.1} parent=43 // pred_check
          %p330 = pneg %p84
        $region46: #{tpu_custom_call.1} parent=43 // pred_check_branch
          %332 = sbr.rel (%p330) target = $region48
        $region47: #{tpu_custom_call.1} parent=43 // pred_region
          %s333 = sand.u32 %s69, 1
          %s334 = scalar_lea.sflag [#allocation6], %s333
          %s335 = sand.u32 %s69, 1
          %s336 = scalar_lea.vmem [#allocation5], %s335
          %338 = dma.done %s334, 16
        $region48: #{tpu_custom_call.1} parent=43 // pred_fallthru
          _
        // Predicated region
        $region49: #{tpu_custom_call.1} parent=43 // pred_check
          %p339 = pneg %p110
        $region50: #{tpu_custom_call.1} parent=43 // pred_check_branch
          %341 = sbr.rel (%p339) target = $region52
        $region51: #{tpu_custom_call.1} parent=43 // pred_region
          %s342 = sand.u32 %s95, 1
          %s343 = scalar_lea.sflag [#allocation8], %s342
          %s344 = sand.u32 %s95, 1
          %s345 = scalar_lea.vmem [#allocation7], %s344
          %347 = dma.done %s343, 16
        $region52: #{tpu_custom_call.1} parent=43 // pred_fallthru
          _
      $region44: #{tpu_custom_call.1} parent=5 // pred_fallthru
        _
    $region6: #{tpu_custom_call.1} parent=1 // loop_footer
      %s19 = sadd.s32 1, %s15
    $region7: #{tpu_custom_call.1} parent=1 // loop_footer_branch
      %14 = sbr.rel target = $region3
    $region8: #{tpu_custom_call.1} parent=1 // loop_exit
      _
    %348 = vsyncpa [#allocation6], 1
    %s349 = scalar_lea.sflag [#allocation6], 1
    %350 = vsyncpa %s349, 1
    %351 = vsyncpa [#allocation8], 1
    %s352 = scalar_lea.sflag [#allocation8], 1
    %353 = vsyncpa %s352, 1

</llo_original>
